<compile_context>
chip_gen: v7x
topology: tpu7x:2x2x1
jax: 0.10.0
libtpu: 0.0.40
codegen_flags: <defaults>
</compile_context>

<pallas_src>
import functools

import numpy as np

import jax
import jax.numpy as jnp
from jax.experimental import pallas as pl
from jax.experimental.pallas import tpu as pltpu

_K = 8            # padded feature width: cx, cy, area, 1, 0, 0, 0, 0
_P = 128 // _K    # 16 logical rows per physical row -> 128-lane input slab
_VMEM_BUDGET = 12 * 1024 * 1024   # stay under v5e's 16 MiB scoped-VMEM default
_TRP_CAP = 4096                   # max packed rows per tile (review: 2048-4096)


def _round_up(x, m):
    return ((x + m - 1) // m) * m


def _cdiv(a, b):
    return -(-a // b)


def _dual_tensorcore():
    # v7x has 2 TensorCores per chip; v5e/v6e have 1.
    try:
        kind = jax.devices()[0].device_kind.lower()
        return ("v7" in kind) or ("7x" in kind)
    except Exception:
        return False


def _centre_area_kernel(feat_ref, w_ref, out_ref):
    # feat_ref: [TRp, 128], w_ref: [128, 16*H] (block-diagonal, bias folded in),
    # out_ref: [TRp, 16*H]. Single MXU matmul; kernel is HBM/store-bound.
    # TODO(synk): if exact f32 parity with torch Linear is required for huge
    # pixel coordinates, add precision=jax.lax.Precision.HIGHEST here.
    out_ref[...] = jnp.dot(
        feat_ref[...], w_ref[...], preferred_element_type=jnp.float32
    ).astype(out_ref.dtype)


@functools.lru_cache(maxsize=None)
def _build_call(tiles, trp, pk, ph):
    call = pl.pallas_call(
        _centre_area_kernel,
        out_shape=jax.ShapeDtypeStruct((tiles * trp, ph), jnp.float32),
        grid=(tiles,),
        in_specs=[
            pl.BlockSpec((trp, pk), lambda i: (i, 0)),   # row-streamed features
            pl.BlockSpec((pk, ph), lambda i: (0, 0)),    # resident weight
        ],
        out_specs=pl.BlockSpec((trp, ph), lambda i: (i, 0)),
        compiler_params=pltpu.CompilerParams(
            dimension_semantics=("parallel",)),
    )
    return jax.jit(call)   # jit -> compilation cached across calls


class CentreAreaQueryEncodingPallas:
    """Pallas port of CentreAreaQueryEncoding (forward only).

    weight_t: [3, H] (transposed torch Linear weight), bias: [H].
    __call__(batch) -> [ML, B, H], batch = list of dicts with
    'boxes' [n,4] (x1,y1,x2,y2), 'area' [n], 'size' [2].
    """

    def __init__(self, num_queries, hidden_dim, weight_t, bias, norm=False):
        self.num_queries = num_queries            # ctor parity; unused in forward
        self.hidden_dim = int(hidden_dim)
        self.norm = bool(norm)

        w8 = np.zeros((_K, self.hidden_dim), np.float32)
        w8[:3, :] = np.asarray(jax.device_get(weight_t), np.float32)
        w8[3, :] = np.asarray(jax.device_get(bias), np.float32)   # bias via ones col
        # Built & uploaded ONCE per module instance (not per forward call).
        self._w_big = jnp.asarray(np.kron(np.eye(_P, dtype=np.float32), w8))
        self._dual_tc = _dual_tensorcore()

    def _pick_tiling(self, Rp, H):
        PK, PH = _P * _K, _P * H
        per_row = 2 * 4 * (PK + PH)          # double-buffered input + output rows
        fixed = 2 * 4 * PK * PH              # weight (conservatively 2x)
        trp_cap = max(8, ((_VMEM_BUDGET - fixed) // per_row) // 8 * 8)
        trp_max = min(_TRP_CAP, trp_cap)

        tiles = max(1, _cdiv(Rp, trp_max))
        if self._dual_tc:
            if tiles == 1 and Rp > 8:
                tiles = 2                    # keep both v7x TensorCores busy
            elif tiles > 1 and tiles % 2 == 1:
                tiles += 1                   # even split across the 2 cores
        trp = max(8, _round_up(_cdiv(Rp, tiles), 8))
        return tiles, trp

    def __call__(self, batch):
        H = self.hidden_dim
        B = len(batch)

        # One batched D2H transfer for the whole batch (no per-field sync copies).
        host = jax.device_get(
            [{"boxes": b["boxes"], "area": b["area"], "size": b["size"]}
             for b in batch])

        ml = max(int(np.asarray(b["boxes"]).shape[0]) for b in host)
        if ml == 0:
            ml = 1

        R = ml * B                    # flat logical rows, ordered m*B + b
        Rp = _cdiv(R, _P)             # packed physical rows needed
        tiles, trp = self._pick_tiling(Rp, H)
        rp_pad = tiles * trp
        r_pad = rp_pad * _P
        PK, PH = _P * _K, _P * H

        # ---- host-side packing (numpy): one [r_pad, K] slab
        feat = np.zeros((r_pad, _K), np.float32)
        feat[:, 3] = 1.0              # ones column -> bias (padded rows give bias)
        feat_mb = feat[:R].reshape(ml, B, _K)       # view, row order = m*B + b
        for b_idx, b in enumerate(host):
            boxes = np.asarray(b["boxes"], np.float32)
            n = boxes.shape[0]
            if n == 0:
                continue
            area = np.asarray(b["area"], np.float32)
            if self.norm:
                area = area / float(np.prod(np.asarray(b["size"], np.float32)))
            feat_mb[:n, b_idx, 0] = 0.5 * (boxes[:, 0] + boxes[:, 2])
            feat_mb[:n, b_idx, 1] = 0.5 * (boxes[:, 1] + boxes[:, 3])
            feat_mb[:n, b_idx, 2] = area
        feat_packed = jnp.asarray(feat.reshape(rp_pad, PK))   # 128-lane slab

        out_packed = _build_call(tiles, trp, PK, PH)(feat_packed, self._w_big)

        # Free reshapes (row order already m*B + b): no transpose needed.
        out_flat = out_packed.reshape(r_pad, H)[:R]
        return out_flat.reshape(ml, B, H)


# ------------------------- pure-JAX reference ------------------------------
def _reference(batch, weight_t, bias, norm=False):
    ml = max(int(b["boxes"].shape[0]) for b in batch)
    if ml == 0:
        ml = 1
    feats = []
    for b in batch:
        n = int(b["boxes"].shape[0])
        bx = jnp.asarray(b["boxes"], jnp.float32)
        cx = (bx[:, 0] + bx[:, 2]) / 2
        cy = (bx[:, 1] + bx[:, 3]) / 2
        ar = jnp.asarray(b["area"], jnp.float32)
        if norm:
            ar = ar / jnp.prod(jnp.asarray(b["size"], jnp.float32))
        feat = jnp.stack([cx, cy, ar], axis=1)                      # [n, 3]
        feat = jnp.concatenate(
            [feat, jnp.zeros((ml - n, 3), jnp.float32)], axis=0)    # [ML, 3]
        feats.append(feat @ weight_t + bias)                         # [ML, H]
    return jnp.stack(feats, axis=1)                                  # [ML, B, H]


if __name__ == "__main__":
    key = jax.random.PRNGKey(0)
    hidden_dim = 32
    num_queries = 8   # ctor parity with the module; unused by forward

    k_w, k_b, k1, k2, k3, k4, k5, k6 = jax.random.split(key, 8)
    weight_t = jax.random.normal(k_w, (3, hidden_dim), jnp.float32) * 0.1
    bias = jax.random.normal(k_b, (hidden_dim,), jnp.float32) * 0.1

    def make_elem(kb, ka, n):
        xy = jax.random.uniform(kb, (n, 2), jnp.float32) * 10.0
        wh = jax.random.uniform(ka, (n, 2), jnp.float32) * 5.0 + 0.5
        boxes = jnp.concatenate([xy, xy + wh], axis=1)               # [n, 4]
        area = wh[:, 0] * wh[:, 1]                                   # [n]
        size = jnp.array([16.0, 16.0], jnp.float32)
        return {"boxes": boxes, "area": area, "size": size}

    # --- small ragged batch: box counts 5 and 8 -> ML = 8, B = 2.
    batch = [make_elem(k1, k2, 5), make_elem(k3, k4, 8)]

    enc = CentreAreaQueryEncodingPallas(num_queries, hidden_dim, weight_t, bias)
    out = jax.block_until_ready(enc(batch))
    ref = _reference(batch, weight_t, bias, norm=False)
    assert out.shape == ref.shape == (8, 2, hidden_dim), out.shape
    assert jnp.allclose(out, ref, atol=1e-5, rtol=1e-5), float(
        jnp.max(jnp.abs(out - ref)))

    # --- norm=True path.
    enc_n = CentreAreaQueryEncodingPallas(num_queries, hidden_dim, weight_t,
                                          bias, norm=True)
    out_n = jax.block_until_ready(enc_n(batch))
    ref_n = _reference(batch, weight_t, bias, norm=True)
    assert jnp.allclose(out_n, ref_n, atol=1e-5, rtol=1e-5), float(
        jnp.max(jnp.abs(out_n - ref_n)))

    # --- medium ragged batch (exercises intra-tile padding + tile sizing).
    batch2 = [make_elem(k1, k2, 57), make_elem(k3, k4, 200), make_elem(k5, k6, 123)]
    out2 = jax.block_until_ready(enc(batch2))
    ref2 = _reference(batch2, weight_t, bias, norm=False)
    assert out2.shape == ref2.shape == (200, 3, hidden_dim), out2.shape
    assert jnp.allclose(out2, ref2, atol=1e-5, rtol=1e-5), float(
        jnp.max(jnp.abs(out2 - ref2)))

    print("KERNEL_OK")
</pallas_src>

<mosaic_0001>
module attributes {stable_mosaic.version = 11 : i64} {
  func.func @_centre_area_kernel(%arg0: i32, %arg1: memref<8x128xf32, #tpu.memory_space<vmem>>, %arg2: memref<128x512xf32, #tpu.memory_space<vmem>>, %arg3: memref<8x512xf32, #tpu.memory_space<vmem>>) attributes {dimension_semantics = [#tpu.dimension_semantics<parallel>], iteration_bounds = array<i64: 1>, scalar_prefetch = 0 : i64, scratch_operands = 0 : i64, tpu.core_type = #tpu.core_type<tc>, window_params = [{transform_indices = @transform_0, window_bounds = array<i64: 8, 128>}, {pipeline_mode = #tpu.pipeline_mode<synchronous>, transform_indices = @transform_1, window_bounds = array<i64: 128, 512>}, {transform_indices = @transform_2, window_bounds = array<i64: 8, 512>}]} {
    %c0 = arith.constant 0 : index
    %c0_0 = arith.constant 0 : index
    %0 = vector.load %arg1[%c0, %c0_0] : memref<8x128xf32, #tpu.memory_space<vmem>>, vector<8x128xf32>
    %c0_1 = arith.constant 0 : index
    %c0_2 = arith.constant 0 : index
    %1 = vector.load %arg2[%c0_1, %c0_2] : memref<128x512xf32, #tpu.memory_space<vmem>>, vector<128x512xf32>
    %cst = arith.constant dense<0.000000e+00> : vector<8x512xf32>
    %2 = tpu.matmul %0, %1, %cst {dimension_numbers = #tpu.dot_dimension_numbers<[1], [0], [0], [1], [0, 0, 1, 1], [], []>} : vector<8x128xf32>, vector<128x512xf32>, vector<8x512xf32> -> vector<8x512xf32>
    %c0_3 = arith.constant 0 : index
    %c0_4 = arith.constant 0 : index
    %3 = vector.load %arg3[%c0_3, %c0_4] : memref<8x512xf32, #tpu.memory_space<vmem>>, vector<8x512xf32>
    tpu.vector_store %arg3[%c0_3, %c0_4], %2 {strides = array<i32>} : memref<8x512xf32, #tpu.memory_space<vmem>>, vector<8x512xf32>,
    return
  }
  func.func @transform_0(%arg0: i32) -> (i32, i32) {
    %c0_i32 = arith.constant 0 : i32
    %c0_i32_0 = arith.constant 0 : i32
    return %arg0, %c0_i32 : i32, i32
  }
  func.func @transform_1(%arg0: i32) -> (i32, i32) {
    %c0_i32 = arith.constant 0 : i32
    %c0_i32_0 = arith.constant 0 : i32
    %c0_i32_1 = arith.constant 0 : i32
    return %c0_i32, %c0_i32_0 : i32, i32
  }
  func.func @transform_2(%arg0: i32) -> (i32, i32) {
    %c0_i32 = arith.constant 0 : i32
    %c0_i32_0 = arith.constant 0 : i32
    return %arg0, %c0_i32 : i32, i32
  }
}

</mosaic_0001>

<llo_original>
// kernel: tpu_custom_call.1
$region0: #{tpu_custom_call.1}
  #allocation0 [shape = 'u32[]', space=smem, size = 0x4, offset = 0x4, fixed_abs, tag = 'smem constant byte address 0x4 - core index']
  #allocation1 [shape = 'u32[144,128]{1,0:T(1,128)}', space=vmem, size = 0x12000, scoped, tag = 'internal scratch']
  %s0 = inlined_call_operand.hbm [shape: f32[8,128], index: 0, kind: input, shape index: {}]
  %s1 = inlined_call_operand.hbm [shape: f32[128,512], index: 1, kind: input, shape index: {}]
  %s2 = inlined_call_operand.hbm [shape: f32[8,512], index: 2, kind: output, shape index: {}]
  %s3 = sld [smem:[#allocation0]]
  $region26: #{tpu_custom_call.1} parent=0
    _
  %s5 = ssub.s32 1, %s3
  %s6 = scalar_select 0, %s5, %s3
  $region1: #{tpu_custom_call.1} parent=0
    #allocation2 [shape = 'u8[4096]{0}', space=vmem, size = 0x1000, scoped, tag = 'input window, operand 0, single buffered']
    #allocation3 [shape = 's32[1]{0}', space=sflag, size = 0x4, scoped, tag = 'scoped memory for tpu_custom_call.1']
    #allocation4 [shape = 's32[1]{0}', space=sflag, size = 0x4, scoped, tag = 'scoped memory for tpu_custom_call.1']
    #allocation5 [shape = 'u8[262144]{0}', space=vmem, size = 0x40000, scoped, tag = 'input window, operand 1, single buffered']
    #allocation6 [shape = 's32[1]{0}', space=sflag, size = 0x4, scoped, tag = 'scoped memory for tpu_custom_call.1']
    #allocation7 [shape = 'u8[16384]{0}', space=vmem, size = 0x4000, scoped, tag = 'output window, operand 0, single buffered']
    %7 = vsyncpa [#allocation3], 0
    %8 = vsyncpa [#allocation6], 0
    %9 = vsyncpa [#allocation4], 0
    // Predicated region
    $region2: #{tpu_custom_call.1} parent=1 // pred_check
      _
    $region3: #{tpu_custom_call.1} parent=1 // pred_check_branch
      %11 = sbr.rel (0) target = $region5
    $region4: #{tpu_custom_call.1} parent=1 // pred_region
      %s13 = ssub.s32 128, 128
      %14 = vsyncadd [#allocation3], %s13
      %s16 = sshll.u32 [#allocation2], 4
      %s17 = int_to_ptr.vmem [resolvable:$true] %s16
      %19 = dma.hbm_to_vmem [thread:$0]  %s0, 128, %s17, [#allocation3]
    $region5: #{tpu_custom_call.1} parent=1 // pred_fallthru
      _
    // Predicated region
    $region6: #{tpu_custom_call.1} parent=1 // pred_check
      _
    $region7: #{tpu_custom_call.1} parent=1 // pred_check_branch
      %21 = sbr.rel (0) target = $region9
    $region8: #{tpu_custom_call.1} parent=1 // pred_region
      %s23 = ssub.s32 8192, 8192
      %24 = vsyncadd [#allocation6], %s23
      %s25 = sshll.u32 [#allocation5], 4
      %s26 = int_to_ptr.vmem [resolvable:$true] %s25
      %31 = dma.hbm_to_vmem [thread:$0]  %s1, 8192, %s26, [#allocation6], 512, 512, 32
    $region9: #{tpu_custom_call.1} parent=1 // pred_fallthru
      _
    // Predicated region
    $region10: #{tpu_custom_call.1} parent=1 // pred_check
      _
    $region11: #{tpu_custom_call.1} parent=1 // pred_check_branch
      %33 = sbr.rel (0) target = $region13
    $region12: #{tpu_custom_call.1} parent=1 // pred_region
      %34 = dma.done [#allocation3], 128
    $region13: #{tpu_custom_call.1} parent=1 // pred_fallthru
      _
    // Predicated region
    $region14: #{tpu_custom_call.1} parent=1 // pred_check
      _
    $region15: #{tpu_custom_call.1} parent=1 // pred_check_branch
      %36 = sbr.rel (0) target = $region17
    $region16: #{tpu_custom_call.1} parent=1 // pred_region
      %37 = dma.done [#allocation6], 8192
    $region17: #{tpu_custom_call.1} parent=1 // pred_fallthru
      _
    %v38 = vld [vmem:[#allocation2] sm:$0xff]
    %v39 = vld [vmem:[#allocation5] sm:$0xff]
    %v40 = vld [vmem:[#allocation5 + $0x8] sm:$0xff]
    %v41 = vld [vmem:[#allocation5 + $0x10] sm:$0xff]
    %v42 = vld [vmem:[#allocation5 + $0x18] sm:$0xff]
    %v43 = vld [vmem:[#allocation5 + $0x20] sm:$0xff]
    %v44 = vld [vmem:[#allocation5 + $0x28] sm:$0xff]
    %v45 = vld [vmem:[#allocation5 + $0x30] sm:$0xff]
    %v46 = vld [vmem:[#allocation5 + $0x38] sm:$0xff]
    %v47 = vld [vmem:[#allocation5 + $0x40] sm:$0xff]
    %v48 = vld [vmem:[#allocation5 + $0x48] sm:$0xff]
    %v49 = vld [vmem:[#allocation5 + $0x50] sm:$0xff]
    %v50 = vld [vmem:[#allocation5 + $0x58] sm:$0xff]
    %v51 = vld [vmem:[#allocation5 + $0x60] sm:$0xff]
    %v52 = vld [vmem:[#allocation5 + $0x68] sm:$0xff]
    %v53 = vld [vmem:[#allocation5 + $0x70] sm:$0xff]
    %v54 = vld [vmem:[#allocation5 + $0x78] sm:$0xff]
    %v55 = vld [vmem:[#allocation5 + $0x80] sm:$0xff]
    %v56 = vld [vmem:[#allocation5 + $0x88] sm:$0xff]
    %v57 = vld [vmem:[#allocation5 + $0x90] sm:$0xff]
    %v58 = vld [vmem:[#allocation5 + $0x98] sm:$0xff]
    %v59 = vld [vmem:[#allocation5 + $0xa0] sm:$0xff]
    %v60 = vld [vmem:[#allocation5 + $0xa8] sm:$0xff]
    %v61 = vld [vmem:[#allocation5 + $0xb0] sm:$0xff]
    %v62 = vld [vmem:[#allocation5 + $0xb8] sm:$0xff]
    %v63 = vld [vmem:[#allocation5 + $0xc0] sm:$0xff]
    %v64 = vld [vmem:[#allocation5 + $0xc8] sm:$0xff]
    %v65 = vld [vmem:[#allocation5 + $0xd0] sm:$0xff]
    %v66 = vld [vmem:[#allocation5 + $0xd8] sm:$0xff]
    %v67 = vld [vmem:[#allocation5 + $0xe0] sm:$0xff]
    %v68 = vld [vmem:[#allocation5 + $0xe8] sm:$0xff]
    %v69 = vld [vmem:[#allocation5 + $0xf0] sm:$0xff]
    %v70 = vld [vmem:[#allocation5 + $0xf8] sm:$0xff]
    %v71 = vld [vmem:[#allocation5 + $0x100] sm:$0xff]
    %v72 = vld [vmem:[#allocation5 + $0x108] sm:$0xff]
    %v73 = vld [vmem:[#allocation5 + $0x110] sm:$0xff]
    %v74 = vld [vmem:[#allocation5 + $0x118] sm:$0xff]
    %v75 = vld [vmem:[#allocation5 + $0x120] sm:$0xff]
    %v76 = vld [vmem:[#allocation5 + $0x128] sm:$0xff]
    %v77 = vld [vmem:[#allocation5 + $0x130] sm:$0xff]
    %v78 = vld [vmem:[#allocation5 + $0x138] sm:$0xff]
    %v79 = vld [vmem:[#allocation5 + $0x140] sm:$0xff]
    %v80 = vld [vmem:[#allocation5 + $0x148] sm:$0xff]
    %v81 = vld [vmem:[#allocation5 + $0x150] sm:$0xff]
    %v82 = vld [vmem:[#allocation5 + $0x158] sm:$0xff]
    %v83 = vld [vmem:[#allocation5 + $0x160] sm:$0xff]
    %v84 = vld [vmem:[#allocation5 + $0x168] sm:$0xff]
    %v85 = vld [vmem:[#allocation5 + $0x170] sm:$0xff]
    %v86 = vld [vmem:[#allocation5 + $0x178] sm:$0xff]
    %v87 = vld [vmem:[#allocation5 + $0x180] sm:$0xff]
    %v88 = vld [vmem:[#allocation5 + $0x188] sm:$0xff]
    %v89 = vld [vmem:[#allocation5 + $0x190] sm:$0xff]
    %v90 = vld [vmem:[#allocation5 + $0x198] sm:$0xff]
    %v91 = vld [vmem:[#allocation5 + $0x1a0] sm:$0xff]
    %v92 = vld [vmem:[#allocation5 + $0x1a8] sm:$0xff]
    %v93 = vld [vmem:[#allocation5 + $0x1b0] sm:$0xff]
    %v94 = vld [vmem:[#allocation5 + $0x1b8] sm:$0xff]
    %v95 = vld [vmem:[#allocation5 + $0x1c0] sm:$0xff]
    %v96 = vld [vmem:[#allocation5 + $0x1c8] sm:$0xff]
    %v97 = vld [vmem:[#allocation5 + $0x1d0] sm:$0xff]
    %v98 = vld [vmem:[#allocation5 + $0x1d8] sm:$0xff]
    %v99 = vld [vmem:[#allocation5 + $0x1e0] sm:$0xff]
    %v100 = vld [vmem:[#allocation5 + $0x1e8] sm:$0xff]
    %v101 = vld [vmem:[#allocation5 + $0x1f0] sm:$0xff]
    %v102 = vld [vmem:[#allocation5 + $0x1f8] sm:$0xff]
    %103 = vmatprep.subr.mxu0 %v40
    %104 = vmatpush1.msra.mxu0 %v39
    %105 = vmatprep.subr.mxu0 %v44
    %106 = vmatpush1.msra.mxu0 %v43
    %107 = vmatprep.subr.mxu0 %v48
    %108 = vmatpush1.msra.mxu0 %v47
    %109 = vmatprep.subr.mxu0 %v52
    %110 = vmatpush1.msra.mxu0 %v51
    %111 = vmatprep.subr.mxu0 %v56
    %112 = vmatpush1.msra.mxu0 %v55
    %113 = vmatprep.subr.mxu0 %v60
    %114 = vmatpush1.msra.mxu0 %v59
    %115 = vmatprep.subr.mxu0 %v64
    %116 = vmatpush1.msra.mxu0 %v63
    %117 = vmatprep.subr.mxu0 %v68
    %118 = vmatpush1.msra.mxu0 %v67
    %119 = vmatprep.subr.mxu0 %v72
    %120 = vmatpush1.msra.mxu0 %v71
    %121 = vmatprep.subr.mxu0 %v76
    %122 = vmatpush1.msra.mxu0 %v75
    %123 = vmatprep.subr.mxu0 %v80
    %124 = vmatpush1.msra.mxu0 %v79
    %125 = vmatprep.subr.mxu0 %v84
    %126 = vmatpush1.msra.mxu0 %v83
    %127 = vmatprep.subr.mxu0 %v88
    %128 = vmatpush1.msra.mxu0 %v87
    %129 = vmatprep.subr.mxu0 %v92
    %130 = vmatpush1.msra.mxu0 %v91
    %131 = vmatprep.subr.mxu0 %v96
    %132 = vmatpush1.msra.mxu0 %v95
    %133 = vmatprep.subr.mxu0 %v100
    %134 = vmatpush1.msra.mxu0 %v99
    %135 = vmatprep.subr.mxu0 0.0
    %136 = vmatpush1.msra.mxu0 0.0
    %137 = vmatprep.subr.mxu0 0.0
    %138 = vmatpush1.msra.mxu0 0.0
    %139 = vmatprep.subr.mxu0 0.0
    %140 = vmatpush1.msra.mxu0 0.0
    %141 = vmatprep.subr.mxu0 0.0
    %142 = vmatpush1.msra.mxu0 0.0
    %143 = vmatprep.subr.mxu0 0.0
    %144 = vmatpush1.msra.mxu0 0.0
    %145 = vmatprep.subr.mxu0 0.0
    %146 = vmatpush1.msra.mxu0 0.0
    %147 = vmatprep.subr.mxu0 0.0
    %148 = vmatpush1.msra.mxu0 0.0
    %149 = vmatprep.subr.mxu0 0.0
    %150 = vmatpush1.msra.mxu0 0.0
    %151 = vmatprep.subr.mxu0 0.0
    %152 = vmatpush1.msra.mxu0 0.0
    %153 = vmatprep.subr.mxu0 0.0
    %154 = vmatpush1.msra.mxu0 0.0
    %155 = vmatprep.subr.mxu0 0.0
    %156 = vmatpush1.msra.mxu0 0.0
    %157 = vmatprep.subr.mxu0 0.0
    %158 = vmatpush1.msra.mxu0 0.0
    %159 = vmatprep.subr.mxu0 0.0
    %160 = vmatpush1.msra.mxu0 0.0
    %161 = vmatprep.subr.mxu0 0.0
    %162 = vmatpush1.msra.mxu0 0.0
    %163 = vmatprep.subr.mxu0 0.0
    %164 = vmatpush1.msra.mxu0 0.0
    %165 = vmatprep.subr.mxu0 0.0
    %166 = vmatpush1.msra.mxu0 0.0
    %167 = vmatprep.mubr.f32.mxu0 0.0
    %168 = vmatmul.mubr.f32.gmra.mrb[0].mxu0 %v38
    %v169 = vpop.f32.mrb[0].mxu0
    %v170 = vadd.f32 0.0, %v169
    %v171 = vpop.f32.mrb[0].mxu0
    %v172 = vadd.f32 0.0, %v171
    %173 = vdwg.mxu0
    %174 = vmatprep.subr.mxu0 %v42
    %175 = vmatpush1.msra.mxu0 %v41
    %176 = vmatprep.subr.mxu0 %v46
    %177 = vmatpush1.msra.mxu0 %v45
    %178 = vmatprep.subr.mxu0 %v50
    %179 = vmatpush1.msra.mxu0 %v49
    %180 = vmatprep.subr.mxu0 %v54
    %181 = vmatpush1.msra.mxu0 %v53
    %182 = vmatprep.subr.mxu0 %v58
    %183 = vmatpush1.msra.mxu0 %v57
    %184 = vmatprep.subr.mxu0 %v62
    %185 = vmatpush1.msra.mxu0 %v61
    %186 = vmatprep.subr.mxu0 %v66
    %187 = vmatpush1.msra.mxu0 %v65
    %188 = vmatprep.subr.mxu0 %v70
    %189 = vmatpush1.msra.mxu0 %v69
    %190 = vmatprep.subr.mxu0 %v74
    %191 = vmatpush1.msra.mxu0 %v73
    %192 = vmatprep.subr.mxu0 %v78
    %193 = vmatpush1.msra.mxu0 %v77
    %194 = vmatprep.subr.mxu0 %v82
    %195 = vmatpush1.msra.mxu0 %v81
    %196 = vmatprep.subr.mxu0 %v86
    %197 = vmatpush1.msra.mxu0 %v85
    %198 = vmatprep.subr.mxu0 %v90
    %199 = vmatpush1.msra.mxu0 %v89
    %200 = vmatprep.subr.mxu0 %v94
    %201 = vmatpush1.msra.mxu0 %v93
    %202 = vmatprep.subr.mxu0 %v98
    %203 = vmatpush1.msra.mxu0 %v97
    %204 = vmatprep.subr.mxu0 %v102
    %205 = vmatpush1.msra.mxu0 %v101
    %206 = vmatprep.subr.mxu0 0.0
    %207 = vmatpush1.msra.mxu0 0.0
    %208 = vmatprep.subr.mxu0 0.0
    %209 = vmatpush1.msra.mxu0 0.0
    %210 = vmatprep.subr.mxu0 0.0
    %211 = vmatpush1.msra.mxu0 0.0
    %212 = vmatprep.subr.mxu0 0.0
    %213 = vmatpush1.msra.mxu0 0.0
    %214 = vmatprep.subr.mxu0 0.0
    %215 = vmatpush1.msra.mxu0 0.0
    %216 = vmatprep.subr.mxu0 0.0
    %217 = vmatpush1.msra.mxu0 0.0
    %218 = vmatprep.subr.mxu0 0.0
    %219 = vmatpush1.msra.mxu0 0.0
    %220 = vmatprep.subr.mxu0 0.0
    %221 = vmatpush1.msra.mxu0 0.0
    %222 = vmatprep.subr.mxu0 0.0
    %223 = vmatpush1.msra.mxu0 0.0
    %224 = vmatprep.subr.mxu0 0.0
    %225 = vmatpush1.msra.mxu0 0.0
    %226 = vmatprep.subr.mxu0 0.0
    %227 = vmatpush1.msra.mxu0 0.0
    %228 = vmatprep.subr.mxu0 0.0
    %229 = vmatpush1.msra.mxu0 0.0
    %230 = vmatprep.subr.mxu0 0.0
    %231 = vmatpush1.msra.mxu0 0.0
    %232 = vmatprep.subr.mxu0 0.0
    %233 = vmatpush1.msra.mxu0 0.0
    %234 = vmatprep.subr.mxu0 0.0
    %235 = vmatpush1.msra.mxu0 0.0
    %236 = vmatprep.subr.mxu0 0.0
    %237 = vmatpush1.msra.mxu0 0.0
    %238 = vmatprep.mubr.f32.mxu0 0.0
    %239 = vmatmul.mubr.f32.gmra.mrb[0].mxu0 %v38
    %v240 = vpop.f32.mrb[0].mxu0
    %v241 = vadd.f32 0.0, %v240
    %v242 = vpop.f32.mrb[0].mxu0
    %v243 = vadd.f32 0.0, %v242
    %244 = vdwg.mxu0
    %245 = vst [vmem:[#allocation7] sm:$0xff] %v170
    %246 = vst [vmem:[#allocation7 + $0x8] sm:$0xff] %v172
    %247 = vst [vmem:[#allocation7 + $0x10] sm:$0xff] %v241
    %248 = vst [vmem:[#allocation7 + $0x18] sm:$0xff] %v243
    // Predicated region
    $region18: #{tpu_custom_call.1} parent=1 // pred_check
      _
    $region19: #{tpu_custom_call.1} parent=1 // pred_check_branch
      %250 = sbr.rel (0) target = $region21
    $region20: #{tpu_custom_call.1} parent=1 // pred_region
      %s252 = ssub.s32 512, 512
      %253 = vsyncadd [#allocation4], %s252
      %s255 = sshll.u32 [#allocation7], 4
      %s256 = int_to_ptr.vmem [resolvable:$true] %s255
      %258 = dma.vmem_to_hbm [thread:$0]  %s256, 512, %s2, [#allocation4]
    $region21: #{tpu_custom_call.1} parent=1 // pred_fallthru
      _
    // Predicated region
    $region22: #{tpu_custom_call.1} parent=1 // pred_check
      _
    $region23: #{tpu_custom_call.1} parent=1 // pred_check_branch
      %260 = sbr.rel (0) target = $region25
    $region24: #{tpu_custom_call.1} parent=1 // pred_region
      %261 = dma.done [#allocation4], 512
    $region25: #{tpu_custom_call.1} parent=1 // pred_fallthru
      _
    %262 = vsyncpa [#allocation3], 1
    %263 = vsyncpa [#allocation6], 1
    %264 = vsyncpa [#allocation4], 1

</llo_original>
